<compile_context>
chip_gen: v7x
topology: tpu7x:2x2x1
jax: 0.10.0
libtpu: 0.0.40
codegen_flags: <defaults>
</compile_context>

<pallas_src>
import jax
import jax.numpy as jnp
from jax.experimental import pallas as pl
from jax.experimental.pallas import tpu as pltpu


def _round_up(x, m):
    return ((x + m - 1) // m) * m


def _make_value_kernel(cb, n_chunks):
    """Build the fused MLP kernel for a given lane-chunk size / count."""

    def value_mlp_kernel(x_ref, w1_ref, b1_ref, w2_ref, b2_ref, w3_ref, b3_ref,
                         o_ref):
        # x_ref: (TILE_B, S) f32  -- state rows exactly as laid out in HBM.
        # o_ref: (1, TILE_B) f32  -- lane-dense output row.
        w1t = w1_ref[...]          # (H, S)
        w2t = w2_ref[...]          # (H, H)
        b1 = b1_ref[...]           # (H, 1)
        b2 = b2_ref[...]           # (H, 1)
        w3 = w3_ref[...]           # (H, 1)
        b3 = b3_ref[0]             # scalar (SMEM)

        @pl.loop(0, n_chunks)
        def _(c):
            start = pl.multiple_of(c * cb, cb)
            x = x_ref[pl.ds(start, cb), :]                   # (cb, S) f32
            # fc1 + ReLU: (H, S) @ (S, cb) -> (H, cb); x.T is an in-kernel
            # XLU transpose (batch moves onto the lane axis).
            h1 = jnp.dot(w1t, x.T, preferred_element_type=jnp.float32)
            h1 = jnp.maximum(h1 + b1, 0.0)                   # (H, cb) f32
            # fc2 + ReLU
            h2 = jnp.dot(w2t, h1, preferred_element_type=jnp.float32)
            h2 = jnp.maximum(h2 + b2, 0.0)                   # (H, cb) f32
            # fc3: single output unit -> VPU multiply + sublane reduce,
            # keeping the store lane-dense at (1, cb).
            out = jnp.sum(w3 * h2, axis=0, keepdims=True) + b3
            o_ref[:, pl.ds(start, cb)] = out

    return value_mlp_kernel


def value_forward(state, params, *, max_tile_b=16384):
    """Pallas-fused forward pass of the Value MLP.

    state:  (B, state_size) float32
    params: dict with w1 (S,H), b1 (1,H), w2 (H,H), b2 (1,H), w3 (H,1), b3 (1,1)
    returns (B, 1) float32
    """
    B, S = state.shape
    H = params["w1"].shape[1]

    # Tiny weights, transposed once (negligible) and kept VMEM-resident.
    w1t = params["w1"].T.astype(jnp.float32)           # (H, S)
    w2t = params["w2"].T.astype(jnp.float32)           # (H, H)
    b1c = params["b1"].reshape(H, 1).astype(jnp.float32)
    b2c = params["b2"].reshape(H, 1).astype(jnp.float32)
    w3c = params["w3"].reshape(H, 1).astype(jnp.float32)
    b3s = params["b3"].reshape(1).astype(jnp.float32)   # SMEM scalar

    # Batch tile: 128-aligned, large (amortize grid-step overhead), capped at
    # ~half the (128-rounded) batch so v7x gets >= 2 parallel grid steps.
    Bp = _round_up(B, 128)
    half = _round_up(pl.cdiv(Bp, 2), 128)
    tb = max(128, min(_round_up(max_tile_b, 128), half))
    n_tiles = pl.cdiv(B, tb)          # ragged last tile handled by masking

    # Inner lane-chunk so f32 intermediates stay within the vreg file.
    cb = next(c for c in (512, 256, 128) if tb % c == 0)
    n_chunks = tb // cb

    kernel = _make_value_kernel(cb, n_chunks)

    flops = 2 * B * (S * H + H * H + H)
    bytes_accessed = B * S * 4 + (S * H + H * H + 3 * H + 1) * 4 + B * 4

    out = pl.pallas_call(
        kernel,
        out_shape=jax.ShapeDtypeStruct((1, B), jnp.float32),
        grid_spec=pltpu.PrefetchScalarGridSpec(
            num_scalar_prefetch=0,
            grid=(n_tiles,),
            in_specs=[
                pl.BlockSpec((tb, S), lambda i: (i, 0)),   # state tile (streamed)
                pl.BlockSpec((H, S), lambda i: (0, 0)),    # w1ᵀ (resident)
                pl.BlockSpec((H, 1), lambda i: (0, 0)),    # b1
                pl.BlockSpec((H, H), lambda i: (0, 0)),    # w2ᵀ (resident)
                pl.BlockSpec((H, 1), lambda i: (0, 0)),    # b2
                pl.BlockSpec((H, 1), lambda i: (0, 0)),    # w3 column (resident)
                pl.BlockSpec(memory_space=pltpu.MemorySpace.SMEM),  # b3 scalar
            ],
            out_specs=pl.BlockSpec((1, tb), lambda i: (0, i)),
        ),
        compiler_params=pltpu.CompilerParams(
            dimension_semantics=("parallel",),
            vmem_limit_bytes=32 * 1024 * 1024),
        cost_estimate=pl.CostEstimate(
            flops=flops, transcendentals=0, bytes_accessed=bytes_accessed),
    )(state.astype(jnp.float32), w1t, b1c, w2t, b2c, w3c, b3s)

    return out.reshape(B, 1)  # (1, B) row -> (B, 1); contiguous, no copy


def init_value_params(key, state_size, hidden_size=32):
    """Deterministic init matching nn.Linear's default U(-1/sqrt(in), 1/sqrt(in))."""
    ks = jax.random.split(key, 6)

    def linear(kw, kb, fan_in, fan_out):
        bound = 1.0 / jnp.sqrt(float(fan_in))
        w = jax.random.uniform(kw, (fan_in, fan_out), jnp.float32,
                               minval=-bound, maxval=bound)
        b = jax.random.uniform(kb, (1, fan_out), jnp.float32,
                               minval=-bound, maxval=bound)
        return w, b

    w1, b1 = linear(ks[0], ks[1], state_size, hidden_size)
    w2, b2 = linear(ks[2], ks[3], hidden_size, hidden_size)
    w3, b3 = linear(ks[4], ks[5], hidden_size, 1)
    return {"w1": w1, "b1": b1, "w2": w2, "b2": b2, "w3": w3, "b3": b3}


def value_ref(state, params):
    """Pure-JAX f32 reference for correctness checking."""
    h1 = jnp.maximum(state @ params["w1"] + params["b1"], 0.0)
    h2 = jnp.maximum(h1 @ params["w2"] + params["b2"], 0.0)
    return h2 @ params["w3"] + params["b3"]


if __name__ == "__main__":
    key = jax.random.PRNGKey(0)
    k_param, k_state = jax.random.split(key)

    batch = 8
    state_size = 8
    hidden_size = 32

    params = init_value_params(k_param, state_size, hidden_size)
    state = jax.random.normal(k_state, (batch, state_size), jnp.float32)

    out = jax.block_until_ready(value_forward(state, params))
    ref = value_ref(state, params)
    assert out.shape == (batch, 1), out.shape
    assert jnp.allclose(out, ref, atol=3e-2, rtol=3e-2), (out, ref)

    # Exercise the multi-tile grid path and the ragged (masked) boundary tile.
    state2 = jax.random.normal(jax.random.PRNGKey(1), (200, state_size),
                               jnp.float32)
    out2 = jax.block_until_ready(value_forward(state2, params))
    ref2 = value_ref(state2, params)
    assert out2.shape == (200, 1), out2.shape
    assert jnp.allclose(out2, ref2, atol=3e-2, rtol=3e-2), (out2, ref2)

    print("KERNEL_OK")
</pallas_src>

<mosaic_0001>
module attributes {stable_mosaic.version = 11 : i64} {
  func.func @value_mlp_kernel(%arg0: i32, %arg1: memref<128x8xf32, #tpu.memory_space<vmem>>, %arg2: memref<32x8xf32, #tpu.memory_space<vmem>>, %arg3: memref<32x1xf32, #tpu.memory_space<vmem>>, %arg4: memref<32x32xf32, #tpu.memory_space<vmem>>, %arg5: memref<32x1xf32, #tpu.memory_space<vmem>>, %arg6: memref<32x1xf32, #tpu.memory_space<vmem>>, %arg7: memref<1xf32, #tpu.memory_space<smem>>, %arg8: memref<1x128xf32, #tpu.memory_space<vmem>>) attributes {dimension_semantics = [#tpu.dimension_semantics<parallel>], iteration_bounds = array<i64: 1>, scalar_prefetch = 0 : i64, scratch_operands = 0 : i64, tpu.core_type = #tpu.core_type<tc>, window_params = [{transform_indices = @transform_0, window_bounds = array<i64: 128, 8>}, {pipeline_mode = #tpu.pipeline_mode<synchronous>, transform_indices = @transform_1, window_bounds = array<i64: 32, 8>}, {pipeline_mode = #tpu.pipeline_mode<synchronous>, transform_indices = @transform_2, window_bounds = array<i64: 32, 1>}, {pipeline_mode = #tpu.pipeline_mode<synchronous>, transform_indices = @transform_3, window_bounds = array<i64: 32, 32>}, {pipeline_mode = #tpu.pipeline_mode<synchronous>, transform_indices = @transform_4, window_bounds = array<i64: 32, 1>}, {pipeline_mode = #tpu.pipeline_mode<synchronous>, transform_indices = @transform_5, window_bounds = array<i64: 32, 1>}, {transform_indices = @transform_6, window_bounds = array<i64: 1>}, {transform_indices = @transform_7, window_bounds = array<i64: 1, 128>}]} {
    %c0 = arith.constant 0 : index
    %c0_0 = arith.constant 0 : index
    %0 = vector.load %arg2[%c0, %c0_0] : memref<32x8xf32, #tpu.memory_space<vmem>>, vector<32x8xf32>
    %c0_1 = arith.constant 0 : index
    %c0_2 = arith.constant 0 : index
    %1 = vector.load %arg4[%c0_1, %c0_2] : memref<32x32xf32, #tpu.memory_space<vmem>>, vector<32x32xf32>
    %c0_3 = arith.constant 0 : index
    %c0_4 = arith.constant 0 : index
    %2 = vector.load %arg3[%c0_3, %c0_4] : memref<32x1xf32, #tpu.memory_space<vmem>>, vector<32x1xf32>
    %c0_5 = arith.constant 0 : index
    %c0_6 = arith.constant 0 : index
    %3 = vector.load %arg5[%c0_5, %c0_6] : memref<32x1xf32, #tpu.memory_space<vmem>>, vector<32x1xf32>
    %c0_7 = arith.constant 0 : index
    %c0_8 = arith.constant 0 : index
    %4 = vector.load %arg6[%c0_7, %c0_8] : memref<32x1xf32, #tpu.memory_space<vmem>>, vector<32x1xf32>
    %c0_9 = arith.constant 0 : index
    %5 = memref.load %arg7[%c0_9] : memref<1xf32, #tpu.memory_space<smem>>
    %c0_i32 = arith.constant 0 : i32
    %c1_i32 = arith.constant 1 : i32
    %6 = arith.muli %c0_i32, %c1_i32 : i32
    %c0_i32_10 = arith.constant 0 : i32
    %7 = arith.addi %c0_i32_10, %6 : i32
    %c128_i32 = arith.constant 128 : i32
    %8 = arith.muli %7, %c128_i32 : i32
    %9 = tpu.assume_multiple %8, 128 : i32
    %10 = arith.index_cast %9 : i32 to index
    %c0_11 = arith.constant 0 : index
    %11 = vector.load %arg1[%10, %c0_11] : memref<128x8xf32, #tpu.memory_space<vmem>>, vector<128x8xf32>
    %12 = tpu.transpose %11, [1, 0] : vector<128x8xf32> -> vector<8x128xf32>
    %cst = arith.constant dense<0.000000e+00> : vector<32x128xf32>
    %13 = tpu.matmul %0, %12, %cst {dimension_numbers = #tpu.dot_dimension_numbers<[1], [0], [0], [1], [0, 0, 1, 1], [], []>} : vector<32x8xf32>, vector<8x128xf32>, vector<32x128xf32> -> vector<32x128xf32>
    %14 = vector.broadcast %2 : vector<32x1xf32> to vector<32x128xf32>
    %15 = arith.addf %13, %14 : vector<32x128xf32>
    %cst_12 = arith.constant 0.000000e+00 : f32
    %16 = vector.broadcast %cst_12 : f32 to vector<32x128xf32>
    %17 = arith.maximumf %15, %16 : vector<32x128xf32>
    %cst_13 = arith.constant dense<0.000000e+00> : vector<32x128xf32>
    %18 = tpu.matmul %1, %17, %cst_13 {dimension_numbers = #tpu.dot_dimension_numbers<[1], [0], [0], [1], [0, 0, 1, 1], [], []>} : vector<32x32xf32>, vector<32x128xf32>, vector<32x128xf32> -> vector<32x128xf32>
    %19 = vector.broadcast %3 : vector<32x1xf32> to vector<32x128xf32>
    %20 = arith.addf %18, %19 : vector<32x128xf32>
    %cst_14 = arith.constant 0.000000e+00 : f32
    %21 = vector.broadcast %cst_14 : f32 to vector<32x128xf32>
    %22 = arith.maximumf %20, %21 : vector<32x128xf32>
    %23 = vector.broadcast %4 : vector<32x1xf32> to vector<32x128xf32>
    %24 = arith.mulf %23, %22 : vector<32x128xf32>
    %cst_15 = arith.constant dense<0.000000e+00> : vector<128xf32>
    %25 = vector.multi_reduction <add>, %24, %cst_15 [0] : vector<32x128xf32> to vector<128xf32>
    %26 = vector.shape_cast %25 : vector<128xf32> to vector<1x128xf32>
    %27 = vector.broadcast %5 : f32 to vector<1x128xf32>
    %28 = arith.addf %26, %27 : vector<1x128xf32>
    %c0_16 = arith.constant 0 : index
    %29 = arith.index_cast %9 : i32 to index
    %30 = vector.load %arg8[%c0_16, %29] : memref<1x128xf32, #tpu.memory_space<vmem>>, vector<1x128xf32>
    tpu.vector_store %arg8[%c0_16, %29], %28 {strides = array<i32>} : memref<1x128xf32, #tpu.memory_space<vmem>>, vector<1x128xf32>,
    %c1_i32_17 = arith.constant 1 : i32
    return
  }
  func.func @transform_0(%arg0: i32) -> (i32, i32) {
    %c0_i32 = arith.constant 0 : i32
    %c0_i32_0 = arith.constant 0 : i32
    return %arg0, %c0_i32 : i32, i32
  }
  func.func @transform_1(%arg0: i32) -> (i32, i32) {
    %c0_i32 = arith.constant 0 : i32
    %c0_i32_0 = arith.constant 0 : i32
    %c0_i32_1 = arith.constant 0 : i32
    return %c0_i32, %c0_i32_0 : i32, i32
  }
  func.func @transform_2(%arg0: i32) -> (i32, i32) {
    %c0_i32 = arith.constant 0 : i32
    %c0_i32_0 = arith.constant 0 : i32
    %c0_i32_1 = arith.constant 0 : i32
    return %c0_i32, %c0_i32_0 : i32, i32
  }
  func.func @transform_3(%arg0: i32) -> (i32, i32) {
    %c0_i32 = arith.constant 0 : i32
    %c0_i32_0 = arith.constant 0 : i32
    %c0_i32_1 = arith.constant 0 : i32
    return %c0_i32, %c0_i32_0 : i32, i32
  }
  func.func @transform_4(%arg0: i32) -> (i32, i32) {
    %c0_i32 = arith.constant 0 : i32
    %c0_i32_0 = arith.constant 0 : i32
    %c0_i32_1 = arith.constant 0 : i32
    return %c0_i32, %c0_i32_0 : i32, i32
  }
  func.func @transform_5(%arg0: i32) -> (i32, i32) {
    %c0_i32 = arith.constant 0 : i32
    %c0_i32_0 = arith.constant 0 : i32
    %c0_i32_1 = arith.constant 0 : i32
    return %c0_i32, %c0_i32_0 : i32, i32
  }
  func.func @transform_6(%arg0: i32) -> i32 {
    %c0_i32 = arith.constant 0 : i32
    %c0_i32_0 = arith.constant 0 : i32
    return %c0_i32 : i32
  }
  func.func @transform_7(%arg0: i32) -> (i32, i32) {
    %c0_i32 = arith.constant 0 : i32
    %c0_i32_0 = arith.constant 0 : i32
    return %c0_i32, %arg0 : i32, i32
  }
}

</mosaic_0001>

<llo_original>
// kernel: tpu_custom_call.1
$region0: #{tpu_custom_call.1}
  #allocation0 [shape = 'u32[]', space=smem, size = 0x4, offset = 0x4, fixed_abs, tag = 'smem constant byte address 0x4 - core index']
  #allocation1 [shape = 'u32[144,128]{1,0:T(1,128)}', space=vmem, size = 0x12000, scoped, tag = 'internal scratch']
  #allocation2 [shape = 'f32[1]{0:T(128)S(6)}', space=smem, size = 0x200, scoped, tag = 'scoped memory for tpu_custom_call.1']
  %s0 = inlined_call_operand.vmem [shape: f32[8,8], index: 0, kind: input, shape index: {}]
  %s1 = inlined_call_operand.vmem [shape: f32[32,8], index: 1, kind: input, shape index: {}]
  %s2 = inlined_call_operand.vmem [shape: f32[32,1], index: 2, kind: input, shape index: {}]
  %s3 = inlined_call_operand.vmem [shape: f32[32,32], index: 3, kind: input, shape index: {}]
  %s4 = inlined_call_operand.vmem [shape: f32[32,1], index: 4, kind: input, shape index: {}]
  %s5 = inlined_call_operand.vmem [shape: f32[32,1], index: 5, kind: input, shape index: {}]
  %s6 = inlined_call_operand.<no memory space> [shape: f32[1], index: 6, kind: input, shape index: {}]
  %s7 = inlined_call_operand.hbm [shape: f32[1,8], index: 7, kind: output, shape index: {}]
  %s8 = sld [smem:[#allocation0]]
  $region38: #{tpu_custom_call.1} parent=0
    _
  %s10 = ssub.s32 1, %s8
  %s11 = scalar_select 0, %s10, %s8
  %12 = sst [smem:[#allocation2]] %s6
  $region1: #{tpu_custom_call.1} parent=0
    #allocation3 [shape = 'u8[512]{0}', space=vmem, size = 0x400, scoped, tag = 'output window, operand 0, single buffered']
    #allocation4 [shape = 's32[1]{0}', space=sflag, size = 0x4, scoped, tag = 'scoped memory for tpu_custom_call.1']
    %13 = vsyncpa [#allocation4], 0
    // Predicated region
    $region2: #{tpu_custom_call.1} parent=1 // pred_check
      _
    $region3: #{tpu_custom_call.1} parent=1 // pred_check_branch
      %15 = sbr.rel (0) target = $region5
    $region4: #{tpu_custom_call.1} parent=1 // pred_region
      _
    $region5: #{tpu_custom_call.1} parent=1 // pred_fallthru
      _
    // Predicated region
    $region6: #{tpu_custom_call.1} parent=1 // pred_check
      _
    $region7: #{tpu_custom_call.1} parent=1 // pred_check_branch
      %17 = sbr.rel (0) target = $region9
    $region8: #{tpu_custom_call.1} parent=1 // pred_region
      _
    $region9: #{tpu_custom_call.1} parent=1 // pred_fallthru
      _
    // Predicated region
    $region10: #{tpu_custom_call.1} parent=1 // pred_check
      _
    $region11: #{tpu_custom_call.1} parent=1 // pred_check_branch
      %19 = sbr.rel (0) target = $region13
    $region12: #{tpu_custom_call.1} parent=1 // pred_region
      _
    $region13: #{tpu_custom_call.1} parent=1 // pred_fallthru
      _
    // Predicated region
    $region14: #{tpu_custom_call.1} parent=1 // pred_check
      _
    $region15: #{tpu_custom_call.1} parent=1 // pred_check_branch
      %21 = sbr.rel (0) target = $region17
    $region16: #{tpu_custom_call.1} parent=1 // pred_region
      _
    $region17: #{tpu_custom_call.1} parent=1 // pred_fallthru
      _
    // Predicated region
    $region18: #{tpu_custom_call.1} parent=1 // pred_check
      _
    $region19: #{tpu_custom_call.1} parent=1 // pred_check_branch
      %23 = sbr.rel (0) target = $region21
    $region20: #{tpu_custom_call.1} parent=1 // pred_region
      _
    $region21: #{tpu_custom_call.1} parent=1 // pred_fallthru
      _
    // Predicated region
    $region22: #{tpu_custom_call.1} parent=1 // pred_check
      _
    $region23: #{tpu_custom_call.1} parent=1 // pred_check_branch
      %25 = sbr.rel (0) target = $region25
    $region24: #{tpu_custom_call.1} parent=1 // pred_region
      _
    $region25: #{tpu_custom_call.1} parent=1 // pred_fallthru
      _
    // Predicated region
    $region26: #{tpu_custom_call.1} parent=1 // pred_check
      _
    $region27: #{tpu_custom_call.1} parent=1 // pred_check_branch
      %27 = sbr.rel (0) target = $region29
    $region28: #{tpu_custom_call.1} parent=1 // pred_region
      _
    $region29: #{tpu_custom_call.1} parent=1 // pred_fallthru
      _
    %v28 = vld [vmem:[%s1] sm:$0xff]
    %v29 = vld [vmem:[%s1 + $0x8] sm:$0xff]
    %v30 = vld [vmem:[%s1 + $0x10] sm:$0xff]
    %v31 = vld [vmem:[%s1 + $0x18] sm:$0xff]
    %v32 = vld [vmem:[%s3] sm:$0xff]
    %v33 = vld [vmem:[%s3 + $0x8] sm:$0xff]
    %v34 = vld [vmem:[%s3 + $0x10] sm:$0xff]
    %v35 = vld [vmem:[%s3 + $0x18] sm:$0xff]
    %v36 = vld [vmem:[%s2] sm:$0xff]
    %v37 = vld [vmem:[%s2 + $0x8] sm:$0xff]
    %v38 = vld [vmem:[%s2 + $0x10] sm:$0xff]
    %v39 = vld [vmem:[%s2 + $0x18] sm:$0xff]
    %v40 = vld [vmem:[%s4] sm:$0xff]
    %v41 = vld [vmem:[%s4 + $0x8] sm:$0xff]
    %v42 = vld [vmem:[%s4 + $0x10] sm:$0xff]
    %v43 = vld [vmem:[%s4 + $0x18] sm:$0xff]
    %v44 = vld [vmem:[%s5] sm:$0xff]
    %v45 = vld [vmem:[%s5 + $0x8] sm:$0xff]
    %v46 = vld [vmem:[%s5 + $0x10] sm:$0xff]
    %v47 = vld [vmem:[%s5 + $0x18] sm:$0xff]
    %s48 = sld [smem:[#allocation2]]
    %v49 = vld [vmem:[%s0] sm:$0xff]
    %v50 = vld [vmem:[%s0 + $0x8] sm:$0xff]
    %v51 = vld [vmem:[%s0 + $0x10] sm:$0xff]
    %v52 = vld [vmem:[%s0 + $0x18] sm:$0xff]
    %v53 = vld [vmem:[%s0 + $0x20] sm:$0xff]
    %v54 = vld [vmem:[%s0 + $0x28] sm:$0xff]
    %v55 = vld [vmem:[%s0 + $0x30] sm:$0xff]
    %v56 = vld [vmem:[%s0 + $0x38] sm:$0xff]
    %v57 = vld [vmem:[%s0 + $0x40] sm:$0xff]
    %v58 = vld [vmem:[%s0 + $0x48] sm:$0xff]
    %v59 = vld [vmem:[%s0 + $0x50] sm:$0xff]
    %v60 = vld [vmem:[%s0 + $0x58] sm:$0xff]
    %v61 = vld [vmem:[%s0 + $0x60] sm:$0xff]
    %v62 = vld [vmem:[%s0 + $0x68] sm:$0xff]
    %v63 = vld [vmem:[%s0 + $0x70] sm:$0xff]
    %v64 = vld [vmem:[%s0 + $0x78] sm:$0xff]
    %66 = vset.pattern.permute.xlu0 0
    %67 = vperm.xlu0 %66, %v36
    %v68 = vpop.permute.xlu0 %67
    %71 = vset.pattern.permute.xlu0 0
    %72 = vperm.xlu0 %71, %v37
    %v73 = vpop.permute.xlu0 %72
    %76 = vset.pattern.permute.xlu0 0
    %77 = vperm.xlu0 %76, %v38
    %v78 = vpop.permute.xlu0 %77
    %81 = vset.pattern.permute.xlu0 0
    %82 = vperm.xlu0 %81, %v39
    %v83 = vpop.permute.xlu0 %82
    %vm85 = vcmask 64512
    %v87 = vsel %vm85, %v28, 0
    %v90 = vsel %vm85, %v29, 0
    %v93 = vsel %vm85, %v30, 0
    %v96 = vsel %vm85, %v31, 0
    %v99 = vsel %vm85, %v49, 0
    %v102 = vsel %vm85, %v50, 0
    %v105 = vsel %vm85, %v51, 0
    %v108 = vsel %vm85, %v52, 0
    %v111 = vsel %vm85, %v53, 0
    %v114 = vsel %vm85, %v54, 0
    %v117 = vsel %vm85, %v55, 0
    %v120 = vsel %vm85, %v56, 0
    %v123 = vsel %vm85, %v57, 0
    %v126 = vsel %vm85, %v58, 0
    %v129 = vsel %vm85, %v59, 0
    %v132 = vsel %vm85, %v60, 0
    %v135 = vsel %vm85, %v61, 0
    %v138 = vsel %vm85, %v62, 0
    %v141 = vsel %vm85, %v63, 0
    %v144 = vsel %vm85, %v64, 0
    %146 = vmatprep.subr.mxu0 0.0
    %147 = vmatpush1.xpose.msra.mxu0 %v99
    %148 = vmatprep.subr.mxu0 0.0
    %149 = vmatpush1.xpose.msra.mxu0 %v102
    %150 = vmatprep.subr.mxu0 0.0
    %151 = vmatpush1.xpose.msra.mxu0 %v105
    %152 = vmatprep.subr.mxu0 0.0
    %153 = vmatpush1.xpose.msra.mxu0 %v108
    %154 = vmatprep.subr.mxu0 0.0
    %155 = vmatpush1.xpose.msra.mxu0 %v111
    %156 = vmatprep.subr.mxu0 0.0
    %157 = vmatpush1.xpose.msra.mxu0 %v114
    %158 = vmatprep.subr.mxu0 0.0
    %159 = vmatpush1.xpose.msra.mxu0 %v117
    %160 = vmatprep.subr.mxu0 0.0
    %161 = vmatpush1.xpose.msra.mxu0 %v120
    %162 = vmatprep.subr.mxu0 0.0
    %163 = vmatpush1.xpose.msra.mxu0 %v123
    %164 = vmatprep.subr.mxu0 0.0
    %165 = vmatpush1.xpose.msra.mxu0 %v126
    %166 = vmatprep.subr.mxu0 0.0
    %167 = vmatpush1.xpose.msra.mxu0 %v129
    %168 = vmatprep.subr.mxu0 0.0
    %169 = vmatpush1.xpose.msra.mxu0 %v132
    %170 = vmatprep.subr.mxu0 0.0
    %171 = vmatpush1.xpose.msra.mxu0 %v135
    %172 = vmatprep.subr.mxu0 0.0
    %173 = vmatpush1.xpose.msra.mxu0 %v138
    %174 = vmatprep.subr.mxu0 0.0
    %175 = vmatpush1.xpose.msra.mxu0 %v141
    %176 = vmatprep.subr.mxu0 0.0
    %177 = vmatpush1.xpose.msra.mxu0 %v144
    %178 = vmatprep.subr.mxu0 0.0
    %179 = vmatpush1.xpose.msra.mxu0 0.0
    %180 = vmatprep.subr.mxu0 0.0
    %181 = vmatpush1.xpose.msra.mxu0 0.0
    %182 = vmatprep.subr.mxu0 0.0
    %183 = vmatpush1.xpose.msra.mxu0 0.0
    %184 = vmatprep.subr.mxu0 0.0
    %185 = vmatpush1.xpose.msra.mxu0 0.0
    %186 = vmatprep.subr.mxu0 0.0
    %187 = vmatpush1.xpose.msra.mxu0 0.0
    %188 = vmatprep.subr.mxu0 0.0
    %189 = vmatpush1.xpose.msra.mxu0 0.0
    %190 = vmatprep.subr.mxu0 0.0
    %191 = vmatpush1.xpose.msra.mxu0 0.0
    %192 = vmatprep.subr.mxu0 0.0
    %193 = vmatpush1.xpose.msra.mxu0 0.0
    %194 = vmatprep.subr.mxu0 0.0
    %195 = vmatpush1.xpose.msra.mxu0 0.0
    %196 = vmatprep.subr.mxu0 0.0
    %197 = vmatpush1.xpose.msra.mxu0 0.0
    %198 = vmatprep.subr.mxu0 0.0
    %199 = vmatpush1.xpose.msra.mxu0 0.0
    %200 = vmatprep.subr.mxu0 0.0
    %201 = vmatpush1.xpose.msra.mxu0 0.0
    %202 = vmatprep.subr.mxu0 0.0
    %203 = vmatpush1.xpose.msra.mxu0 0.0
    %204 = vmatprep.subr.mxu0 0.0
    %205 = vmatpush1.xpose.msra.mxu0 0.0
    %206 = vmatprep.subr.mxu0 0.0
    %207 = vmatpush1.xpose.msra.mxu0 0.0
    %208 = vmatprep.subr.mxu0 0.0
    %209 = vmatpush1.xpose.msra.mxu0 0.0
    %210 = vmatprep.mubr.f32.mxu0 0.0
    %211 = vmatmul.mubr.f32.gmra.mrb[0].mxu0 %v87
    %v212 = vpop.f32.mrb[0].mxu0
    %v213 = vadd.f32 %v68, %v212
    %v214 = vpop.f32.mrb[0].mxu0
    %215 = vmatprep.mubr.f32.mxu0 0.0
    %216 = vmatmul.mubr.f32.gmra.mrb[0].mxu0 %v90
    %v217 = vpop.f32.mrb[0].mxu0
    %v218 = vadd.f32 %v73, %v217
    %v219 = vpop.f32.mrb[0].mxu0
    %220 = vmatprep.mubr.f32.mxu0 0.0
    %221 = vmatmul.mubr.f32.gmra.mrb[0].mxu0 %v93
    %v222 = vpop.f32.mrb[0].mxu0
    %v223 = vadd.f32 %v78, %v222
    %v224 = vpop.f32.mrb[0].mxu0
    %225 = vmatprep.mubr.f32.mxu0 0.0
    %226 = vmatmul.mubr.f32.gmra.mrb[0].mxu0 %v96
    %v227 = vpop.f32.mrb[0].mxu0
    %v228 = vadd.f32 %v83, %v227
    %v229 = vpop.f32.mrb[0].mxu0
    %230 = vdwg.mxu0
    %v231 = vmax.f32 %v213, 0.0
    %v232 = vmax.f32 %v218, 0.0
    %v233 = vmax.f32 %v223, 0.0
    %v234 = vmax.f32 %v228, 0.0
    %236 = vset.pattern.permute.xlu0 0
    %237 = vperm.xlu0 %236, %v40
    %v238 = vpop.permute.xlu0 %237
    %241 = vset.pattern.permute.xlu0 0
    %242 = vperm.xlu0 %241, %v41
    %v243 = vpop.permute.xlu0 %242
    %246 = vset.pattern.permute.xlu0 0
    %247 = vperm.xlu0 %246, %v42
    %v248 = vpop.permute.xlu0 %247
    %251 = vset.pattern.permute.xlu0 0
    %252 = vperm.xlu0 %251, %v43
    %v253 = vpop.permute.xlu0 %252
    %vm255 = vcmask 261120
    %v257 = vsel %vm255, %v32, 0
    %v260 = vsel %vm255, %v33, 0
    %v263 = vsel %vm255, %v34, 0
    %v266 = vsel %vm255, %v35, 0
    %268 = vmatprep.subr.mxu0 0.0
    %269 = vmatpush1.msra.mxu0 %v231
    %270 = vmatprep.subr.mxu0 0.0
    %271 = vmatpush1.msra.mxu0 %v232
    %272 = vmatprep.subr.mxu0 0.0
    %273 = vmatpush1.msra.mxu0 %v233
    %274 = vmatprep.subr.mxu0 0.0
    %275 = vmatpush1.msra.mxu0 %v234
    %276 = vmatprep.subr.mxu0 0.0
    %277 = vmatpush1.msra.mxu0 0.0
    %278 = vmatprep.subr.mxu0 0.0
    %279 = vmatpush1.msra.mxu0 0.0
    %280 = vmatprep.subr.mxu0 0.0
    %281 = vmatpush1.msra.mxu0 0.0
    %282 = vmatprep.subr.mxu0 0.0
    %283 = vmatpush1.msra.mxu0 0.0
    %284 = vmatprep.subr.mxu0 0.0
    %285 = vmatpush1.msra.mxu0 0.0
    %286 = vmatprep.subr.mxu0 0.0
    %287 = vmatpush1.msra.mxu0 0.0
    %288 = vmatprep.subr.mxu0 0.0
    %289 = vmatpush1.msra.mxu0 0.0
    %290 = vmatprep.subr.mxu0 0.0
    %291 = vmatpush1.msra.mxu0 0.0
    %292 = vmatprep.subr.mxu0 0.0
    %293 = vmatpush1.msra.mxu0 0.0
    %294 = vmatprep.subr.mxu0 0.0
    %295 = vmatpush1.msra.mxu0 0.0
    %296 = vmatprep.subr.mxu0 0.0
    %297 = vmatpush1.msra.mxu0 0.0
    %298 = vmatprep.subr.mxu0 0.0
    %299 = vmatpush1.msra.mxu0 0.0
    %300 = vmatprep.subr.mxu0 0.0
    %301 = vmatpush1.msra.mxu0 0.0
    %302 = vmatprep.subr.mxu0 0.0
    %303 = vmatpush1.msra.mxu0 0.0
    %304 = vmatprep.subr.mxu0 0.0
    %305 = vmatpush1.msra.mxu0 0.0
    %306 = vmatprep.subr.mxu0 0.0
    %307 = vmatpush1.msra.mxu0 0.0
    %308 = vmatprep.subr.mxu0 0.0
    %309 = vmatpush1.msra.mxu0 0.0
    %310 = vmatprep.subr.mxu0 0.0
    %311 = vmatpush1.msra.mxu0 0.0
    %312 = vmatprep.subr.mxu0 0.0
    %313 = vmatpush1.msra.mxu0 0.0
    %314 = vmatprep.subr.mxu0 0.0
    %315 = vmatpush1.msra.mxu0 0.0
    %316 = vmatprep.subr.mxu0 0.0
    %317 = vmatpush1.msra.mxu0 0.0
    %318 = vmatprep.subr.mxu0 0.0
    %319 = vmatpush1.msra.mxu0 0.0
    %320 = vmatprep.subr.mxu0 0.0
    %321 = vmatpush1.msra.mxu0 0.0
    %322 = vmatprep.subr.mxu0 0.0
    %323 = vmatpush1.msra.mxu0 0.0
    %324 = vmatprep.subr.mxu0 0.0
    %325 = vmatpush1.msra.mxu0 0.0
    %326 = vmatprep.subr.mxu0 0.0
    %327 = vmatpush1.msra.mxu0 0.0
    %328 = vmatprep.subr.mxu0 0.0
    %329 = vmatpush1.msra.mxu0 0.0
    %330 = vmatprep.subr.mxu0 0.0
    %331 = vmatpush1.msra.mxu0 0.0
    %332 = vmatprep.mubr.f32.mxu0 0.0
    %333 = vmatmul.mubr.f32.gmra.mrb[0].mxu0 %v257
    %v334 = vpop.f32.mrb[0].mxu0
    %v335 = vadd.f32 %v238, %v334
    %v336 = vpop.f32.mrb[0].mxu0
    %337 = vmatprep.mubr.f32.mxu0 0.0
    %338 = vmatmul.mubr.f32.gmra.mrb[0].mxu0 %v260
    %v339 = vpop.f32.mrb[0].mxu0
    %v340 = vadd.f32 %v243, %v339
    %v341 = vpop.f32.mrb[0].mxu0
    %342 = vmatprep.mubr.f32.mxu0 0.0
    %343 = vmatmul.mubr.f32.gmra.mrb[0].mxu0 %v263
    %v344 = vpop.f32.mrb[0].mxu0
    %v345 = vadd.f32 %v248, %v344
    %v346 = vpop.f32.mrb[0].mxu0
    %347 = vmatprep.mubr.f32.mxu0 0.0
    %348 = vmatmul.mubr.f32.gmra.mrb[0].mxu0 %v266
    %v349 = vpop.f32.mrb[0].mxu0
    %v350 = vadd.f32 %v253, %v349
    %v351 = vpop.f32.mrb[0].mxu0
    %352 = vdwg.mxu0
    %v353 = vmax.f32 %v335, 0.0
    %v354 = vmax.f32 %v340, 0.0
    %v355 = vmax.f32 %v345, 0.0
    %v356 = vmax.f32 %v350, 0.0
    %358 = vset.pattern.permute.xlu0 0
    %359 = vperm.xlu0 %358, %v44
    %v360 = vpop.permute.xlu0 %359
    %363 = vset.pattern.permute.xlu0 0
    %364 = vperm.xlu0 %363, %v45
    %v365 = vpop.permute.xlu0 %364
    %368 = vset.pattern.permute.xlu0 0
    %369 = vperm.xlu0 %368, %v46
    %v370 = vpop.permute.xlu0 %369
    %373 = vset.pattern.permute.xlu0 0
    %374 = vperm.xlu0 %373, %v47
    %v375 = vpop.permute.xlu0 %374
    %v377 = vmul.f32 %v360, %v353
    %v378 = vmul.f32 %v365, %v354
    %v379 = vmul.f32 %v370, %v355
    %v380 = vmul.f32 %v375, %v356
    %v381 = vadd.f32 %v377, %v378
    %v382 = vadd.f32 %v381, %v379
    %v383 = vadd.f32 %v382, %v380
    %v384 = vrot.slane %v383, 4
    %v385 = vadd.f32 %v383, %v384
    %v386 = vrot.slane %v385, 2
    %v387 = vadd.f32 %v385, %v386
    %v388 = vrot.slane %v387, 1
    %v389 = vadd.f32 %v387, %v388
    %v390 = vstv %s48
    %v391 = vadd.f32 %v389, %v390
    %392 = vst [vmem:[#allocation3] sm:$0x1] %v391
    // Predicated region
    $region30: #{tpu_custom_call.1} parent=1 // pred_check
      _
    $region31: #{tpu_custom_call.1} parent=1 // pred_check_branch
      %394 = sbr.rel (0) target = $region33
    $region32: #{tpu_custom_call.1} parent=1 // pred_region
      %s396 = ssub.s32 16, 16
      %397 = vsyncadd [#allocation4], %s396
      %s399 = sshll.u32 [#allocation3], 4
      %s400 = int_to_ptr.vmem [resolvable:$true] %s399
      %402 = dma.vmem_to_hbm [thread:$0]  %s400, 16, %s7, [#allocation4]
    $region33: #{tpu_custom_call.1} parent=1 // pred_fallthru
      _
    // Predicated region
    $region34: #{tpu_custom_call.1} parent=1 // pred_check
      _
    $region35: #{tpu_custom_call.1} parent=1 // pred_check_branch
      %404 = sbr.rel (0) target = $region37
    $region36: #{tpu_custom_call.1} parent=1 // pred_region
      %405 = dma.done [#allocation4], 16
    $region37: #{tpu_custom_call.1} parent=1 // pred_fallthru
      _
    %406 = vsyncpa [#allocation4], 1

</llo_original>
